<compile_context>
chip_gen: v6e
topology: v6e:2x2x1
jax: 0.10.0
libtpu: 0.0.40
codegen_flags: <defaults>
</compile_context>

<pallas_src>
import numpy as np
import jax
import jax.numpy as jnp
from jax.experimental import pallas as pl
from jax.experimental.pallas import tpu as pltpu


def _round_up(x, m):
    return (x + m - 1) // m * m


def _token2vec_kernel(h4_ref, wid_ref, tgt_ref, msk_ref, ctx_ref):
    # h4_ref  : VMEM (Bt, 4, T, tH) bf16   last-4 hidden states (one H tile)
    # wid_ref : VMEM (Bt, 1, T)     i32    word id per token, -1 = special/pad
    # tgt_ref : VMEM (Bt, S, 1)     i32    word index wanted at output row k
    # msk_ref : VMEM (Bt, S, 1)     f32    1.0 where k < end-start else 0.0
    # ctx_ref : VMEM (Bt, S, tH)    f32
    h4 = h4_ref[...]

    # 1) sum of the last four hidden states, accumulated in f32.
    #    (the /4 is folded into the per-word scale below)
    hidden = (h4[:, 0].astype(jnp.float32) + h4[:, 1].astype(jnp.float32)
              + h4[:, 2].astype(jnp.float32) + h4[:, 3].astype(jnp.float32))

    # 2)+3) fused sub-token pooling + span select.
    #    one-hot over tokens, word ids along lanes, output words along
    #    sublanes -> pure VPU compares, no cross-lane relayout.
    onehot = (wid_ref[...] == tgt_ref[...]).astype(jnp.float32)   # (Bt, S, T)

    pooled = jnp.einsum('bst,bth->bsh', onehot, hidden,
                        preferred_element_type=jnp.float32)       # MXU
    counts = jnp.sum(onehot, axis=2, keepdims=True)               # (Bt, S, 1)

    # per-word scale: layer mean (0.25), sub-token mean (1/count) and the
    # span-valid predicate, all on an (S,1) vector.
    scale = msk_ref[...] * (jnp.float32(0.25)
                            / jnp.maximum(counts, jnp.float32(1.0)))

    ctx_ref[...] = (pooled * scale).astype(ctx_ref.dtype)         # lane-dense


def token2vec(hidden4, word_ids, start_pos, end_pos, span_max,
              *, bt=None, th=None):
    """Fused post-transformer part of Token2Vec.forward.

    hidden4 : (B, 4, T, H) float (cast to bf16 internally)
    word_ids: (B, T) int32, -1 for [CLS]/[SEP]/padding
    start/end: (B,) int32 sentence span bounds (in word indices)
    span_max: static int, max(end - start) over the batch

    Returns (context (B, S, H) f32, mask (B, S) bool) with S = span_max.
    """
    B, four, T, H = hidden4.shape
    assert four == 4
    S = int(span_max)
    S_pad = max(8, _round_up(S, 8))          # sublane-aligned output rows

    # --- tile selection -----------------------------------------------------
    if th is None:                           # feature tile: multiple of 128
        th = H
        for cand in (512, 384, 256, 128):
            if H % cand == 0:
                th = cand
                break
    if bt is None:                           # rows per grid step
        bt = 1
        for cand in (8, 4, 2, 1):
            if B % cand == 0:
                bt = cand
                break
        # keep the double-buffered bf16 hidden4 block under ~24 MiB (v7x)
        while bt > 1 and 2 * bt * 4 * T * th * 2 > 24 * 1024 * 1024:
            bt //= 2
    assert B % bt == 0 and H % th == 0

    # --- host-side (wrapper) prep: tiny index / mask tensors ----------------
    start_pos = start_pos.astype(jnp.int32)
    end_pos = end_pos.astype(jnp.int32)
    ks = jnp.arange(S_pad, dtype=jnp.int32)[None, :]             # (1, S_pad)
    tgt = (start_pos[:, None] + ks).reshape(B, S_pad, 1)         # word wanted
    valid = ks < (end_pos - start_pos)[:, None]                  # (B, S_pad)
    msk_f32 = valid.astype(jnp.float32).reshape(B, S_pad, 1)
    wid3 = word_ids.astype(jnp.int32).reshape(B, 1, T)
    h4_bf16 = hidden4.astype(jnp.bfloat16)                       # halve HBM

    # --- VMEM budget (double-buffered blocks + intermediates + headroom) ----
    blk_bytes = (bt * 4 * T * th * 2            # hidden4 block (bf16)
                 + bt * S_pad * th * 4          # ctx block
                 + bt * (T + 2 * S_pad) * 4)    # wid/tgt/msk blocks
    interm = bt * (T * th + S_pad * T + S_pad * th) * 4
    vmem_limit = int(min(max(2 * (2 * blk_bytes + interm), 32 * 1024 * 1024),
                         64 * 1024 * 1024))

    grid = (B // bt, H // th)
    ctx_pad = pl.pallas_call(
        _token2vec_kernel,
        out_shape=jax.ShapeDtypeStruct((B, S_pad, H), jnp.float32),
        grid_spec=pltpu.PrefetchScalarGridSpec(
            num_scalar_prefetch=0,
            grid=grid,
            in_specs=[
                pl.BlockSpec((bt, 4, T, th), lambda i, j: (i, 0, 0, j)),
                pl.BlockSpec((bt, 1, T), lambda i, j: (i, 0, 0)),
                pl.BlockSpec((bt, S_pad, 1), lambda i, j: (i, 0, 0)),
                pl.BlockSpec((bt, S_pad, 1), lambda i, j: (i, 0, 0)),
            ],
            out_specs=pl.BlockSpec((bt, S_pad, th), lambda i, j: (i, 0, j)),
        ),
        compiler_params=pltpu.CompilerParams(
            dimension_semantics=("parallel", "parallel"),
            vmem_limit_bytes=vmem_limit),
    )(h4_bf16, wid3, tgt, msk_f32)

    return ctx_pad[:, :S, :], valid[:, :S]


if __name__ == "__main__":
    key = jax.random.PRNGKey(0)
    B, T, H = 2, 16, 128        # batch, tokens (with specials/pad), hidden_size

    # "Pretrained transformer" outputs: last four hidden states, stacked.
    hidden4 = jax.random.normal(key, (B, 4, T, H), dtype=jnp.float32)

    # word_to_tokens maps: word j of sentence i covers tokens [s, e).
    word_spans = [
        [(1, 2), (2, 4), (4, 5), (5, 7), (7, 8), (8, 10), (10, 11)],  # 7 words
        [(1, 3), (3, 4), (4, 5), (5, 6), (6, 8)],                      # 5 words
    ]
    wid_np = np.full((B, T), -1, dtype=np.int32)     # -1: [CLS]/[SEP]/padding
    for i, spans in enumerate(word_spans):
        for j, (s, e) in enumerate(spans):
            wid_np[i, s:e] = j
    word_ids = jnp.asarray(wid_np)

    start_pos = jnp.asarray([1, 0], dtype=jnp.int32)   # sentence.start_pos
    end_pos = jnp.asarray([6, 4], dtype=jnp.int32)     # sentence.end_pos
    S = int(np.max(np.asarray(end_pos) - np.asarray(start_pos)))   # = 5

    ctx, mask = token2vec(hidden4, word_ids, start_pos, end_pos, S)
    ctx = jax.block_until_ready(ctx)
    mask = jax.block_until_ready(mask)

    # Plain-numpy reference of the same (post-transformer) forward pass,
    # computed from the same bf16-cast hidden states the kernel sees.
    h_bf = np.asarray(hidden4.astype(jnp.bfloat16).astype(jnp.float32))
    h_np = np.mean(h_bf, axis=1)                       # (B, T, H)
    ref_ctx = np.zeros((B, S, H), dtype=np.float32)
    ref_mask = np.zeros((B, S), dtype=bool)
    for i, spans in enumerate(word_spans):
        s0, e0 = int(start_pos[i]), int(end_pos[i])
        for k, w in enumerate(range(s0, e0)):
            ts, te = spans[w]
            ref_ctx[i, k] = h_np[i, ts:te].mean(axis=0)
            ref_mask[i, k] = True
    np.testing.assert_allclose(np.asarray(ctx), ref_ctx, rtol=2e-2, atol=2e-2)
    assert np.array_equal(np.asarray(mask), ref_mask)
    assert ctx.shape == (B, S, H) and mask.shape == (B, S)

    print("KERNEL_OK")
</pallas_src>

<mosaic_0001>
module attributes {stable_mosaic.version = 11 : i64} {
  func.func @_token2vec_kernel(%arg0: i32, %arg1: i32, %arg2: memref<2x4x16x128xbf16, #tpu.memory_space<vmem>>, %arg3: memref<2x1x16xi32, #tpu.memory_space<vmem>>, %arg4: memref<2x8x1xi32, #tpu.memory_space<vmem>>, %arg5: memref<2x8x1xf32, #tpu.memory_space<vmem>>, %arg6: memref<2x8x128xf32, #tpu.memory_space<vmem>>) attributes {dimension_semantics = [#tpu.dimension_semantics<parallel>, #tpu.dimension_semantics<parallel>], iteration_bounds = array<i64: 1, 1>, scalar_prefetch = 0 : i64, scratch_operands = 0 : i64, tpu.core_type = #tpu.core_type<tc>, window_params = [{transform_indices = @transform_0, window_bounds = array<i64: 2, 4, 16, 128>}, {transform_indices = @transform_1, window_bounds = array<i64: 2, 1, 16>}, {transform_indices = @transform_2, window_bounds = array<i64: 2, 8, 1>}, {transform_indices = @transform_3, window_bounds = array<i64: 2, 8, 1>}, {transform_indices = @transform_4, window_bounds = array<i64: 2, 8, 128>}]} {
    %c0 = arith.constant 0 : index
    %c0_0 = arith.constant 0 : index
    %c0_1 = arith.constant 0 : index
    %c0_2 = arith.constant 0 : index
    %0 = vector.load %arg2[%c0, %c0_0, %c0_1, %c0_2] : memref<2x4x16x128xbf16, #tpu.memory_space<vmem>>, vector<2x4x16x128xbf16>
    %1 = vector.extract_strided_slice %0 {offsets = [0, 0, 0, 0], sizes = [2, 1, 16, 128], strides = [1, 1, 1, 1]} : vector<2x4x16x128xbf16> to vector<2x1x16x128xbf16>
    %2 = vector.shape_cast %1 : vector<2x1x16x128xbf16> to vector<2x16x128xbf16>
    %3 = arith.extf %2 : vector<2x16x128xbf16> to vector<2x16x128xf32>
    %4 = vector.extract_strided_slice %0 {offsets = [0, 1, 0, 0], sizes = [2, 1, 16, 128], strides = [1, 1, 1, 1]} : vector<2x4x16x128xbf16> to vector<2x1x16x128xbf16>
    %5 = vector.shape_cast %4 : vector<2x1x16x128xbf16> to vector<2x16x128xbf16>
    %6 = arith.extf %5 : vector<2x16x128xbf16> to vector<2x16x128xf32>
    %7 = arith.addf %3, %6 : vector<2x16x128xf32>
    %8 = vector.extract_strided_slice %0 {offsets = [0, 2, 0, 0], sizes = [2, 1, 16, 128], strides = [1, 1, 1, 1]} : vector<2x4x16x128xbf16> to vector<2x1x16x128xbf16>
    %9 = vector.shape_cast %8 : vector<2x1x16x128xbf16> to vector<2x16x128xbf16>
    %10 = arith.extf %9 : vector<2x16x128xbf16> to vector<2x16x128xf32>
    %11 = arith.addf %7, %10 : vector<2x16x128xf32>
    %12 = vector.extract_strided_slice %0 {offsets = [0, 3, 0, 0], sizes = [2, 1, 16, 128], strides = [1, 1, 1, 1]} : vector<2x4x16x128xbf16> to vector<2x1x16x128xbf16>
    %13 = vector.shape_cast %12 : vector<2x1x16x128xbf16> to vector<2x16x128xbf16>
    %14 = arith.extf %13 : vector<2x16x128xbf16> to vector<2x16x128xf32>
    %15 = arith.addf %11, %14 : vector<2x16x128xf32>
    %c0_3 = arith.constant 0 : index
    %c0_4 = arith.constant 0 : index
    %c0_5 = arith.constant 0 : index
    %16 = vector.load %arg3[%c0_3, %c0_4, %c0_5] : memref<2x1x16xi32, #tpu.memory_space<vmem>>, vector<2x1x16xi32>
    %c0_6 = arith.constant 0 : index
    %c0_7 = arith.constant 0 : index
    %c0_8 = arith.constant 0 : index
    %17 = vector.load %arg4[%c0_6, %c0_7, %c0_8] : memref<2x8x1xi32, #tpu.memory_space<vmem>>, vector<2x8x1xi32>
    %18 = vector.broadcast %16 : vector<2x1x16xi32> to vector<2x8x16xi32>
    %19 = vector.broadcast %17 : vector<2x8x1xi32> to vector<2x8x16xi32>
    %20 = arith.cmpi eq, %18, %19 : vector<2x8x16xi32>
    %21 = arith.extui %20 : vector<2x8x16xi1> to vector<2x8x16xi32>
    %22 = arith.sitofp %21 : vector<2x8x16xi32> to vector<2x8x16xf32>
    "tpu.trace_start"() <{level = 10 : i32, message = "bst,bth->bsh"}> : () -> ()
    %cst = arith.constant dense<0.000000e+00> : vector<2x8x128xf32>
    %23 = tpu.matmul %22, %15, %cst {dimension_numbers = #tpu.dot_dimension_numbers<[2], [1], [1], [2], [0, 0, 0, 1, 1, 2], [0], [0]>} : vector<2x8x16xf32>, vector<2x16x128xf32>, vector<2x8x128xf32> -> vector<2x8x128xf32>
    "tpu.trace_stop"() : () -> ()
    %cst_9 = arith.constant dense<0.000000e+00> : vector<2x8xf32>
    %24 = vector.multi_reduction <add>, %22, %cst_9 [2] : vector<2x8x16xf32> to vector<2x8xf32>
    %25 = vector.shape_cast %24 : vector<2x8xf32> to vector<2x8x1xf32>
    %c0_10 = arith.constant 0 : index
    %c0_11 = arith.constant 0 : index
    %c0_12 = arith.constant 0 : index
    %26 = vector.load %arg5[%c0_10, %c0_11, %c0_12] : memref<2x8x1xf32, #tpu.memory_space<vmem>>, vector<2x8x1xf32>
    %cst_13 = arith.constant 1.000000e+00 : f32
    %27 = vector.broadcast %cst_13 : f32 to vector<2x8x1xf32>
    %28 = arith.maximumf %25, %27 : vector<2x8x1xf32>
    %cst_14 = arith.constant 2.500000e-01 : f32
    %29 = vector.broadcast %cst_14 : f32 to vector<2x8x1xf32>
    %30 = arith.divf %29, %28 : vector<2x8x1xf32>
    %31 = arith.mulf %26, %30 : vector<2x8x1xf32>
    %32 = vector.broadcast %31 : vector<2x8x1xf32> to vector<2x8x128xf32>
    %33 = arith.mulf %23, %32 : vector<2x8x128xf32>
    %c0_15 = arith.constant 0 : index
    %c0_16 = arith.constant 0 : index
    %c0_17 = arith.constant 0 : index
    %34 = vector.load %arg6[%c0_15, %c0_16, %c0_17] : memref<2x8x128xf32, #tpu.memory_space<vmem>>, vector<2x8x128xf32>
    tpu.vector_store %arg6[%c0_15, %c0_16, %c0_17], %33 {strides = array<i32>} : memref<2x8x128xf32, #tpu.memory_space<vmem>>, vector<2x8x128xf32>,
    return
  }
  func.func @transform_0(%arg0: i32, %arg1: i32) -> (i32, i32, i32, i32) {
    %c0_i32 = arith.constant 0 : i32
    %c0_i32_0 = arith.constant 0 : i32
    %c0_i32_1 = arith.constant 0 : i32
    return %arg0, %c0_i32, %c0_i32_0, %arg1 : i32, i32, i32, i32
  }
  func.func @transform_1(%arg0: i32, %arg1: i32) -> (i32, i32, i32) {
    %c0_i32 = arith.constant 0 : i32
    %c0_i32_0 = arith.constant 0 : i32
    %c0_i32_1 = arith.constant 0 : i32
    return %arg0, %c0_i32, %c0_i32_0 : i32, i32, i32
  }
  func.func @transform_2(%arg0: i32, %arg1: i32) -> (i32, i32, i32) {
    %c0_i32 = arith.constant 0 : i32
    %c0_i32_0 = arith.constant 0 : i32
    %c0_i32_1 = arith.constant 0 : i32
    return %arg0, %c0_i32, %c0_i32_0 : i32, i32, i32
  }
  func.func @transform_3(%arg0: i32, %arg1: i32) -> (i32, i32, i32) {
    %c0_i32 = arith.constant 0 : i32
    %c0_i32_0 = arith.constant 0 : i32
    %c0_i32_1 = arith.constant 0 : i32
    return %arg0, %c0_i32, %c0_i32_0 : i32, i32, i32
  }
  func.func @transform_4(%arg0: i32, %arg1: i32) -> (i32, i32, i32) {
    %c0_i32 = arith.constant 0 : i32
    %c0_i32_0 = arith.constant 0 : i32
    return %arg0, %c0_i32, %arg1 : i32, i32, i32
  }
}

</mosaic_0001>

<llo_original>
// kernel: tpu_custom_call.1
$region0: #{tpu_custom_call.1}
  #allocation0 [shape = 'u32[]', space=smem, size = 0x4, offset = 0x4, fixed_abs, tag = 'smem constant byte address 0x4 - core index']
  #allocation1 [shape = 'u32[144,128]{1,0:T(1,128)}', space=vmem, size = 0x12000, scoped, tag = 'internal scratch']
  %s0 = inlined_call_operand.hbm [shape: bf16[2,4,16,128], index: 0, kind: input, shape index: {}]
  %s1 = inlined_call_operand.vmem [shape: s32[2,1,16], index: 1, kind: input, shape index: {}]
  %s2 = inlined_call_operand.vmem [shape: s32[2,8,1], index: 2, kind: input, shape index: {}]
  %s3 = inlined_call_operand.vmem [shape: f32[2,8,1], index: 3, kind: input, shape index: {}]
  %s4 = inlined_call_operand.hbm [shape: f32[2,8,128], index: 4, kind: output, shape index: {}]
  %s5 = sld [smem:[#allocation0]]
  $region30: #{tpu_custom_call.1} parent=0
    _
  %s7 = ssub.s32 1, %s5
  %s8 = scalar_select 0, %s7, %s5
  $region1: #{tpu_custom_call.1} parent=0
    #allocation2 [shape = 'u8[32768]{0}', space=vmem, size = 0x8000, scoped, tag = 'input window, operand 0, single buffered']
    #allocation3 [shape = 's32[1]{0}', space=sflag, size = 0x4, scoped, tag = 'scoped memory for tpu_custom_call.1']
    #allocation4 [shape = 's32[1]{0}', space=sflag, size = 0x4, scoped, tag = 'scoped memory for tpu_custom_call.1']
    #allocation5 [shape = 'u8[8192]{0}', space=vmem, size = 0x2000, scoped, tag = 'output window, operand 0, single buffered']
    %9 = vsyncpa [#allocation3], 0
    %10 = vsyncpa [#allocation4], 0
    // Predicated region
    $region2: #{tpu_custom_call.1} parent=1 // pred_check
      _
    $region3: #{tpu_custom_call.1} parent=1 // pred_check_branch
      %12 = sbr.rel (0) target = $region5
    $region4: #{tpu_custom_call.1} parent=1 // pred_region
      %s14 = ssub.s32 1024, 1024
      %15 = vsyncadd [#allocation3], %s14
      %s16 = sshll.u32 [#allocation2], 4
      %s17 = int_to_ptr.vmem [resolvable:$true] %s16
      %22 = dma.hbm_to_vmem [thread:$0]  %s0, 1024, %s17, [#allocation3], 64, 64, 4
    $region5: #{tpu_custom_call.1} parent=1 // pred_fallthru
      _
    // Predicated region
    $region6: #{tpu_custom_call.1} parent=1 // pred_check
      _
    $region7: #{tpu_custom_call.1} parent=1 // pred_check_branch
      %24 = sbr.rel (0) target = $region9
    $region8: #{tpu_custom_call.1} parent=1 // pred_region
      _
    $region9: #{tpu_custom_call.1} parent=1 // pred_fallthru
      _
    // Predicated region
    $region10: #{tpu_custom_call.1} parent=1 // pred_check
      _
    $region11: #{tpu_custom_call.1} parent=1 // pred_check_branch
      %26 = sbr.rel (0) target = $region13
    $region12: #{tpu_custom_call.1} parent=1 // pred_region
      _
    $region13: #{tpu_custom_call.1} parent=1 // pred_fallthru
      _
    // Predicated region
    $region14: #{tpu_custom_call.1} parent=1 // pred_check
      _
    $region15: #{tpu_custom_call.1} parent=1 // pred_check_branch
      %28 = sbr.rel (0) target = $region17
    $region16: #{tpu_custom_call.1} parent=1 // pred_region
      _
    $region17: #{tpu_custom_call.1} parent=1 // pred_fallthru
      _
    // Predicated region
    $region18: #{tpu_custom_call.1} parent=1 // pred_check
      _
    $region19: #{tpu_custom_call.1} parent=1 // pred_check_branch
      %30 = sbr.rel (0) target = $region21
    $region20: #{tpu_custom_call.1} parent=1 // pred_region
      %31 = dma.done [#allocation3], 1024
    $region21: #{tpu_custom_call.1} parent=1 // pred_fallthru
      _
    %v32 = vld [vmem:[#allocation2] sm:$0xf]
    %v33 = vld [vmem:[#allocation2 + $0x4] sm:$0xf]
    %v34 = vld [vmem:[#allocation2 + $0x8] sm:$0xf]
    %v35 = vld [vmem:[#allocation2 + $0xc] sm:$0xf]
    %v36 = vld [vmem:[#allocation2 + $0x10] sm:$0xf]
    %v37 = vld [vmem:[#allocation2 + $0x14] sm:$0xf]
    %v38 = vld [vmem:[#allocation2 + $0x18] sm:$0xf]
    %v39 = vld [vmem:[#allocation2 + $0x1c] sm:$0xf]
    %v40 = vld [vmem:[#allocation2 + $0x20] sm:$0xf]
    %v41 = vld [vmem:[#allocation2 + $0x24] sm:$0xf]
    %v42 = vld [vmem:[#allocation2 + $0x28] sm:$0xf]
    %v43 = vld [vmem:[#allocation2 + $0x2c] sm:$0xf]
    %v44 = vld [vmem:[#allocation2 + $0x30] sm:$0xf]
    %v45 = vld [vmem:[#allocation2 + $0x34] sm:$0xf]
    %v46 = vld [vmem:[#allocation2 + $0x38] sm:$0xf]
    %v47 = vld [vmem:[#allocation2 + $0x3c] sm:$0xf]
    %v48 = vunpack.c.l.bf16 %v32
    %v49 = vunpack.c.l.bf16 %v33
    %v50 = vunpack.c.l.bf16 %v40
    %v51 = vunpack.c.l.bf16 %v41
    %v52 = vunpack.c.l.bf16 %v34
    %v53 = vunpack.c.l.bf16 %v35
    %v54 = vunpack.c.l.bf16 %v42
    %v55 = vunpack.c.l.bf16 %v43
    %v56 = vadd.f32 %v48, %v52
    %v57 = vadd.f32 %v49, %v53
    %v58 = vadd.f32 %v50, %v54
    %v59 = vadd.f32 %v51, %v55
    %v60 = vunpack.c.l.bf16 %v36
    %v61 = vunpack.c.l.bf16 %v37
    %v62 = vunpack.c.l.bf16 %v44
    %v63 = vunpack.c.l.bf16 %v45
    %v64 = vadd.f32 %v56, %v60
    %v65 = vadd.f32 %v57, %v61
    %v66 = vadd.f32 %v58, %v62
    %v67 = vadd.f32 %v59, %v63
    %v68 = vunpack.c.l.bf16 %v38
    %v69 = vunpack.c.l.bf16 %v39
    %v70 = vunpack.c.l.bf16 %v46
    %v71 = vunpack.c.l.bf16 %v47
    %v72 = vadd.f32 %v64, %v68
    %v73 = vadd.f32 %v65, %v69
    %v74 = vadd.f32 %v66, %v70
    %v75 = vadd.f32 %v67, %v71
    %v76 = vld [vmem:[%s1] sm:$0x1]
    %v77 = vld [vmem:[%s1 + $0x1] sm:$0x1]
    %v78 = vld [vmem:[%s2] sm:$0xff]
    %v79 = vld [vmem:[%s2 + $0x8] sm:$0xff]
    %v80 = vlaneseq
    %v81 = vshrl.u32 %v80, 7
    %v82 = vsub.s32 0, %v81
    %v83 = vrot.slane %v76, %v82
    %v84 = vlaneseq
    %v85 = vshrl.u32 %v84, 7
    %v86 = vsub.s32 0, %v85
    %v87 = vrot.slane %v77, %v86
    %88 = vset.pattern.permute.xlu0 0
    %89 = vperm.xlu0 %88, %v78
    %v90 = vpop.permute.xlu0 %89
    %91 = vset.pattern.permute.xlu0 0
    %92 = vperm.xlu0 %91, %v79
    %v93 = vpop.permute.xlu0 %92
    %vm94 = vcmp.eq.s32.totalorder %v83, %v90
    %vm95 = vcmp.eq.s32.totalorder %v87, %v93
    %v96 = vsel %vm94, 1, 0
    %v97 = vsel %vm95, 1, 0
    %v98 = vcvt.s32.f32 %v96
    %v99 = vcvt.s32.f32 %v97
    %vm100 = vcmask 130048
    %v102 = vsel %vm100, %v98, 0
    %104 = vmatprep.subr.mxu0 0.0
    %105 = vmatpush1.msra.mxu0 0.0
    %106 = vmatprep.subr.mxu0 0.0
    %107 = vmatpush1.msra.mxu0 0.0
    %108 = vmatprep.subr.mxu0 0.0
    %109 = vmatpush1.msra.mxu0 0.0
    %110 = vmatprep.subr.mxu0 0.0
    %111 = vmatpush1.msra.mxu0 0.0
    %112 = vmatprep.subr.mxu0 0.0
    %113 = vmatpush1.msra.mxu0 0.0
    %114 = vmatprep.subr.mxu0 0.0
    %115 = vmatpush1.msra.mxu0 0.0
    %116 = vmatprep.subr.mxu0 0.0
    %117 = vmatpush1.msra.mxu0 0.0
    %118 = vmatprep.subr.mxu0 0.0
    %119 = vmatpush1.msra.mxu0 0.0
    %120 = vmatprep.subr.mxu0 0.0
    %121 = vmatpush1.msra.mxu0 0.0
    %122 = vmatprep.subr.mxu0 0.0
    %123 = vmatpush1.msra.mxu0 0.0
    %124 = vmatprep.subr.mxu0 0.0
    %125 = vmatpush1.msra.mxu0 0.0
    %126 = vmatprep.subr.mxu0 0.0
    %127 = vmatpush1.msra.mxu0 0.0
    %128 = vmatprep.subr.mxu0 0.0
    %129 = vmatpush1.msra.mxu0 0.0
    %130 = vmatprep.subr.mxu0 0.0
    %131 = vmatpush1.msra.mxu0 0.0
    %132 = vmatprep.subr.mxu0 0.0
    %133 = vmatpush1.msra.mxu0 %v73
    %134 = vmatprep.subr.mxu0 0.0
    %135 = vmatpush1.msra.mxu0 %v72
    %136 = vmatprep.subr.mxu0 0.0
    %137 = vmatpush2.msra.mxu0 0.0
    %138 = vmatprep.subr.mxu0 0.0
    %139 = vmatpush2.msra.mxu0 0.0
    %140 = vmatprep.subr.mxu0 0.0
    %141 = vmatpush2.msra.mxu0 0.0
    %142 = vmatprep.subr.mxu0 0.0
    %143 = vmatpush2.msra.mxu0 0.0
    %144 = vmatprep.subr.mxu0 0.0
    %145 = vmatpush2.msra.mxu0 0.0
    %146 = vmatprep.subr.mxu0 0.0
    %147 = vmatpush2.msra.mxu0 0.0
    %148 = vmatprep.subr.mxu0 0.0
    %149 = vmatpush2.msra.mxu0 0.0
    %150 = vmatprep.subr.mxu0 0.0
    %151 = vmatpush2.msra.mxu0 0.0
    %152 = vmatprep.subr.mxu0 0.0
    %153 = vmatpush2.msra.mxu0 0.0
    %154 = vmatprep.subr.mxu0 0.0
    %155 = vmatpush2.msra.mxu0 0.0
    %156 = vmatprep.subr.mxu0 0.0
    %157 = vmatpush2.msra.mxu0 0.0
    %158 = vmatprep.subr.mxu0 0.0
    %159 = vmatpush2.msra.mxu0 0.0
    %160 = vmatprep.subr.mxu0 0.0
    %161 = vmatpush2.msra.mxu0 0.0
    %162 = vmatprep.subr.mxu0 0.0
    %163 = vmatpush2.msra.mxu0 0.0
    %164 = vmatprep.subr.mxu0 0.0
    %165 = vmatpush2.msra.mxu0 0.0
    %166 = vmatprep.subr.mxu0 0.0
    %167 = vmatpush2.msra.mxu0 0.0
    %168 = vmatprep.mubr.f32.mxu0 0.0
    %169 = vmatmul.mubr.f32.gmra.mxu0 %v102
    %v170 = vpop.f32.mrf.mxu0
    %v171 = vadd.f32 0.0, %v170
    %v172 = vpop.f32.mrf.mxu0
    %173 = vdwg.mxu0
    %v175 = vsel %vm100, %v99, 0
    %177 = vmatprep.subr.mxu0 0.0
    %178 = vmatpush1.msra.mxu0 0.0
    %179 = vmatprep.subr.mxu0 0.0
    %180 = vmatpush1.msra.mxu0 0.0
    %181 = vmatprep.subr.mxu0 0.0
    %182 = vmatpush1.msra.mxu0 0.0
    %183 = vmatprep.subr.mxu0 0.0
    %184 = vmatpush1.msra.mxu0 0.0
    %185 = vmatprep.subr.mxu0 0.0
    %186 = vmatpush1.msra.mxu0 0.0
    %187 = vmatprep.subr.mxu0 0.0
    %188 = vmatpush1.msra.mxu0 0.0
    %189 = vmatprep.subr.mxu0 0.0
    %190 = vmatpush1.msra.mxu0 0.0
    %191 = vmatprep.subr.mxu0 0.0
    %192 = vmatpush1.msra.mxu0 0.0
    %193 = vmatprep.subr.mxu0 0.0
    %194 = vmatpush1.msra.mxu0 0.0
    %195 = vmatprep.subr.mxu0 0.0
    %196 = vmatpush1.msra.mxu0 0.0
    %197 = vmatprep.subr.mxu0 0.0
    %198 = vmatpush1.msra.mxu0 0.0
    %199 = vmatprep.subr.mxu0 0.0
    %200 = vmatpush1.msra.mxu0 0.0
    %201 = vmatprep.subr.mxu0 0.0
    %202 = vmatpush1.msra.mxu0 0.0
    %203 = vmatprep.subr.mxu0 0.0
    %204 = vmatpush1.msra.mxu0 0.0
    %205 = vmatprep.subr.mxu0 0.0
    %206 = vmatpush1.msra.mxu0 %v75
    %207 = vmatprep.subr.mxu0 0.0
    %208 = vmatpush1.msra.mxu0 %v74
    %209 = vmatprep.subr.mxu0 0.0
    %210 = vmatpush2.msra.mxu0 0.0
    %211 = vmatprep.subr.mxu0 0.0
    %212 = vmatpush2.msra.mxu0 0.0
    %213 = vmatprep.subr.mxu0 0.0
    %214 = vmatpush2.msra.mxu0 0.0
    %215 = vmatprep.subr.mxu0 0.0
    %216 = vmatpush2.msra.mxu0 0.0
    %217 = vmatprep.subr.mxu0 0.0
    %218 = vmatpush2.msra.mxu0 0.0
    %219 = vmatprep.subr.mxu0 0.0
    %220 = vmatpush2.msra.mxu0 0.0
    %221 = vmatprep.subr.mxu0 0.0
    %222 = vmatpush2.msra.mxu0 0.0
    %223 = vmatprep.subr.mxu0 0.0
    %224 = vmatpush2.msra.mxu0 0.0
    %225 = vmatprep.subr.mxu0 0.0
    %226 = vmatpush2.msra.mxu0 0.0
    %227 = vmatprep.subr.mxu0 0.0
    %228 = vmatpush2.msra.mxu0 0.0
    %229 = vmatprep.subr.mxu0 0.0
    %230 = vmatpush2.msra.mxu0 0.0
    %231 = vmatprep.subr.mxu0 0.0
    %232 = vmatpush2.msra.mxu0 0.0
    %233 = vmatprep.subr.mxu0 0.0
    %234 = vmatpush2.msra.mxu0 0.0
    %235 = vmatprep.subr.mxu0 0.0
    %236 = vmatpush2.msra.mxu0 0.0
    %237 = vmatprep.subr.mxu0 0.0
    %238 = vmatpush2.msra.mxu0 0.0
    %239 = vmatprep.subr.mxu0 0.0
    %240 = vmatpush2.msra.mxu0 0.0
    %241 = vmatprep.mubr.f32.mxu0 0.0
    %242 = vmatmul.mubr.f32.gmra.mxu0 %v175
    %v243 = vpop.f32.mrf.mxu0
    %v244 = vadd.f32 0.0, %v243
    %v245 = vpop.f32.mrf.mxu0
    %246 = vdwg.mxu0
    %v247 = vsel %vm100, %v98, 0.0
    %248 = vadd.xlane.f32.xlu0 %v247
    %v249 = vpop.xlane.xlu0 %248
    %v250 = vsel %vm100, %v99, 0.0
    %251 = vadd.xlane.f32.xlu0 %v250
    %v252 = vpop.xlane.xlu0 %251
    %v253 = vld [vmem:[%s3] sm:$0xff]
    %v254 = vld [vmem:[%s3 + $0x8] sm:$0xff]
    %v255 = vmax.f32 %v249, 1.0
    %v256 = vmax.f32 %v252, 1.0
    %v257 = vrcp.pop %v255
    %v258 = vmul.f32 0.25, %v257
    %v259 = vrcp.pop %v256
    %v260 = vmul.f32 0.25, %v259
    %v261 = vmul.f32 %v253, %v258
    %v262 = vmul.f32 %v254, %v260
    %264 = vset.pattern.permute.xlu0 0
    %265 = vperm.xlu0 %264, %v261
    %v266 = vpop.permute.xlu0 %265
    %269 = vset.pattern.permute.xlu0 0
    %270 = vperm.xlu0 %269, %v262
    %v271 = vpop.permute.xlu0 %270
    %v273 = vmul.f32 %v171, %v266
    %v274 = vmul.f32 %v244, %v271
    %275 = vst [vmem:[#allocation5] sm:$0xff] %v273
    %276 = vst [vmem:[#allocation5 + $0x8] sm:$0xff] %v274
    // Predicated region
    $region22: #{tpu_custom_call.1} parent=1 // pred_check
      _
    $region23: #{tpu_custom_call.1} parent=1 // pred_check_branch
      %278 = sbr.rel (0) target = $region25
    $region24: #{tpu_custom_call.1} parent=1 // pred_region
      %s280 = ssub.s32 256, 256
      %281 = vsyncadd [#allocation4], %s280
      %s282 = sshll.u32 [#allocation5], 4
      %s283 = int_to_ptr.vmem [resolvable:$true] %s282
      %288 = dma.vmem_to_hbm [thread:$0]  %s283, 256, %s4, [#allocation4], 128, 128, 8
    $region25: #{tpu_custom_call.1} parent=1 // pred_fallthru
      _
    // Predicated region
    $region26: #{tpu_custom_call.1} parent=1 // pred_check
      _
    $region27: #{tpu_custom_call.1} parent=1 // pred_check_branch
      %290 = sbr.rel (0) target = $region29
    $region28: #{tpu_custom_call.1} parent=1 // pred_region
      %291 = dma.done [#allocation4], 256
    $region29: #{tpu_custom_call.1} parent=1 // pred_fallthru
      _
    %292 = vsyncpa [#allocation3], 1
    %293 = vsyncpa [#allocation4], 1

</llo_original>
